<compile_context>
chip_gen: v7x
topology: tpu7x:2x2x1
jax: 0.10.0
libtpu: 0.0.40
codegen_flags: <defaults>
</compile_context>

<pallas_src>
import functools

import numpy as np
import jax
import jax.numpy as jnp
from jax import lax
from jax.experimental import pallas as pl
from jax.experimental.pallas import tpu as pltpu


def _round_up(x, m):
    return (x + m - 1) // m * m


def _norm_loss_kernel(act_ref, labels_ref, w_ref, wsum_ref, cnt_ref,
                      acc_ref, count_ref, *, norm_type, num_classes, precision):
    s = pl.program_id(1)

    @pl.when(s == 0)
    def _init():
        acc_ref[...] = jnp.zeros_like(acc_ref)
        count_ref[...] = jnp.zeros_like(count_ref)

    act = act_ref[0]                                     # [TILE_S, P_pad]
    c_pad = acc_ref.shape[0]
    tile_s = act.shape[0]

    if norm_type == "l1":
        labels_row = labels_ref[0]                       # [1, TILE_S] int32
        class_iota = lax.broadcasted_iota(jnp.int32, (c_pad, tile_s), 0)
        onehot_b = class_iota == labels_row              # [C_pad, TILE_S]
        # Masked per-class L1 sums as one MXU matmul per tile.
        acc_ref[...] += jnp.dot(onehot_b.astype(act.dtype), jnp.abs(act),
                                preferred_element_type=jnp.float32,
                                precision=precision)
        count_ref[...] += jnp.sum(onehot_b.astype(jnp.float32),
                                  axis=1, keepdims=True)
    else:  # "linf"
        labels_col = labels_ref[0]                       # [TILE_S, 1] int32
        act_abs = jnp.abs(act.astype(jnp.float32))       # [TILE_S, P_pad]
        row_iota = lax.broadcasted_iota(jnp.int32, (c_pad, 1), 0)

        def body(c, carry):
            maskf = (labels_col == c).astype(jnp.float32)       # [TILE_S, 1]
            masked = maskf * act_abs                            # [TILE_S, P_pad]
            tmax = jnp.max(masked, axis=0, keepdims=True)       # [1, P_pad]
            cnt_inc = jnp.sum(maskf, axis=0, keepdims=True)     # [1, 1]
            row_sel = row_iota == c                             # [C_pad, 1]
            acc = acc_ref[...]
            acc_ref[...] = jnp.where(row_sel, jnp.maximum(acc, tmax), acc)
            count_ref[...] = count_ref[...] + jnp.where(row_sel, cnt_inc, 0.0)
            return carry

        lax.fori_loop(0, num_classes, body, 0, unroll=num_classes <= 8)

    @pl.when(s == pl.num_programs(1) - 1)
    def _finalize():
        # Prototype-mean (l1: still un-normalized by pixel count; done in wrapper).
        wsum_ref[0] = jnp.sum(acc_ref[...] * w_ref[...], axis=1, keepdims=True)
        cnt_ref[0] = count_ref[...]


def norm_loss(prototype_activations, target_labels, prototype_class_identity,
              norm_type="l1"):
    """Mirrors NormLoss.forward. Layout/padding glue in JAX, streaming math in Pallas."""
    if norm_type not in ("l1", "linf"):
        raise ValueError(f"unsupported norm_type: {norm_type}")

    identity = jnp.asarray(prototype_class_identity)
    P, C = identity.shape
    B = target_labels.shape[0]

    acts = jnp.reshape(prototype_activations, (B, -1, P))          # [B, S, P]
    labels = jnp.reshape(target_labels, (B, -1)).astype(jnp.int32) - 1  # [B, S]
    S = labels.shape[1]

    P_pad = _round_up(P, 128)
    C_pad = _round_up(C, 8)

    # Tile the spatial axis; keep the double-buffered act tile within a
    # conservative VMEM budget (safe on v5e's 16 MiB scoped default and v7x's
    # 64 MiB physical VMEM).
    itemsize = jnp.dtype(acts.dtype).itemsize
    budget = 8 * 1024 * 1024
    max_tile = max(128, (budget // (2 * P_pad * itemsize)) // 128 * 128)
    TILE_S = int(min(max_tile, _round_up(S, 128), 2048))
    S_pad = _round_up(S, TILE_S)
    n_s = S_pad // TILE_S

    # Pad: activations with zeros (no contribution), labels with -1 (ignored).
    acts_p = jnp.zeros((B, S_pad, P_pad), acts.dtype).at[:, :S, :P].set(acts)
    labels_p = jnp.full((B, S_pad), -1, jnp.int32).at[:, :S].set(labels)

    # Per-class prototype averaging weights, [C_pad, P_pad].
    mask = identity != 0
    n_protos = jnp.sum(mask, axis=0)                               # [C]
    w = mask.T.astype(jnp.float32) / jnp.maximum(n_protos, 1).astype(jnp.float32)[:, None]
    w_p = jnp.zeros((C_pad, P_pad), jnp.float32).at[:C, :P].set(w)

    if norm_type == "l1":
        labels_in = labels_p.reshape(B, 1, S_pad)                  # row layout
        labels_spec = pl.BlockSpec((1, 1, TILE_S), lambda b, s: (b, 0, s))
    else:
        labels_in = labels_p.reshape(B, S_pad, 1)                  # column layout
        labels_spec = pl.BlockSpec((1, TILE_S, 1), lambda b, s: (b, s, 0))

    # Full-f32 MXU passes so masked L1 sums match the f32 reference exactly.
    precision = (jax.lax.Precision.HIGHEST
                 if acts.dtype == jnp.float32 else None)

    kernel = functools.partial(_norm_loss_kernel, norm_type=norm_type,
                               num_classes=C, precision=precision)

    wsum, cnt = pl.pallas_call(
        kernel,
        grid=(B, n_s),
        out_shape=(jax.ShapeDtypeStruct((B, C_pad, 1), jnp.float32),
                   jax.ShapeDtypeStruct((B, C_pad, 1), jnp.float32)),
        in_specs=[
            pl.BlockSpec((1, TILE_S, P_pad), lambda b, s: (b, s, 0)),
            labels_spec,
            pl.BlockSpec((C_pad, P_pad), lambda b, s: (0, 0)),
        ],
        out_specs=(
            pl.BlockSpec((1, C_pad, 1), lambda b, s: (b, 0, 0)),
            pl.BlockSpec((1, C_pad, 1), lambda b, s: (b, 0, 0)),
        ),
        scratch_shapes=[
            pltpu.VMEM((C_pad, P_pad), jnp.float32),   # per-class sum / running max
            pltpu.VMEM((C_pad, 1), jnp.float32),       # per-class pixel counts
        ],
        compiler_params=pltpu.CompilerParams(
            dimension_semantics=("parallel", "arbitrary"),
            vmem_limit_bytes=32 * 1024 * 1024),
    )(acts_p, labels_in, w_p)

    wsum = wsum[:, :C, 0]                                          # [B, C]
    cnt = cnt[:, :C, 0]                                            # [B, C]
    has_protos = (identity != 0).any(axis=0)                       # [C]

    term = wsum / jnp.maximum(cnt, 1.0) if norm_type == "l1" else wsum
    validf = jnp.logical_and(cnt > 0.0, has_protos[None, :]).astype(jnp.float32)
    total = jnp.sum(term * validf)
    n_valid = jnp.sum(validf)
    return jnp.where(n_valid > 0.0, total / jnp.maximum(n_valid, 1.0),
                     jnp.zeros_like(total))


def _ref_norm_loss(acts, labels, identity, norm_type):
    """NumPy transcription of the PyTorch forward, for verification."""
    B = labels.shape[0]
    labels = labels.reshape(B, -1).astype(np.int64) - 1
    acts = acts.reshape(B, -1, identity.shape[0])
    C = identity.shape[1]
    terms = []
    for b in range(B):
        for c in np.unique(labels[b]):
            if c < 0 or c >= C:
                continue
            protos = np.nonzero(identity[:, c])[0]
            if len(protos) == 0:
                continue
            m = labels[b] == c
            if m.sum() == 0:
                continue
            vals = []
            for p in protos:
                a = acts[b, :, p][m]
                if norm_type == "l1":
                    vals.append(np.abs(a).sum() / a.shape[0])
                else:
                    vals.append(np.abs(a).max())
            terms.append(float(np.mean(vals)))
    return float(np.mean(terms)) if terms else 0.0


if __name__ == "__main__":
    B, H, W = 2, 8, 8          # batch, spatial
    P, C = 16, 4               # num_prototypes, num_classes

    # Deterministic prototype_class_identity: 4 prototypes per class.
    identity = np.zeros((P, C), np.float32)
    for p in range(P):
        identity[p, p % C] = 1.0

    key = jax.random.PRNGKey(0)
    k1, k2 = jax.random.split(key)
    acts = jax.random.normal(k1, (B, H, W, P), jnp.float32)
    labels = jax.random.randint(k2, (B, H, W), 0, C + 1, dtype=jnp.int32)  # 0 == ignore

    for nt in ("l1", "linf"):
        loss = jax.block_until_ready(norm_loss(acts, labels, identity, norm_type=nt))
        ref = _ref_norm_loss(np.asarray(acts), np.asarray(labels), identity, nt)
        assert abs(float(loss) - ref) < 1e-4, (nt, float(loss), ref)

    print("KERNEL_OK")
</pallas_src>

<mosaic_0001>
module attributes {stable_mosaic.version = 11 : i64} {
  func.func @_norm_loss_kernel(%arg0: i32, %arg1: i32, %arg2: memref<1x128x128xf32, #tpu.memory_space<vmem>>, %arg3: memref<1x1x128xi32, #tpu.memory_space<vmem>>, %arg4: memref<8x128xf32, #tpu.memory_space<vmem>>, %arg5: memref<1x8x1xf32, #tpu.memory_space<vmem>>, %arg6: memref<1x8x1xf32, #tpu.memory_space<vmem>>, %arg7: memref<8x128xf32, #tpu.memory_space<vmem>>, %arg8: memref<8x1xf32, #tpu.memory_space<vmem>>) attributes {dimension_semantics = [#tpu.dimension_semantics<parallel>, #tpu.dimension_semantics<arbitrary>], iteration_bounds = array<i64: 2, 1>, scalar_prefetch = 0 : i64, scratch_operands = 2 : i64, tpu.core_type = #tpu.core_type<tc>, window_params = [{transform_indices = @transform_0, window_bounds = array<i64: 1, 128, 128>}, {transform_indices = @transform_1, window_bounds = array<i64: 1, 1, 128>}, {pipeline_mode = #tpu.pipeline_mode<synchronous>, transform_indices = @transform_2, window_bounds = array<i64: 8, 128>}, {transform_indices = @transform_3, window_bounds = array<i64: 1, 8, 1>}, {transform_indices = @transform_4, window_bounds = array<i64: 1, 8, 1>}]} {
    %c0_i32 = arith.constant 0 : i32
    %0 = arith.cmpi eq, %arg1, %c0_i32 : i32
    %1 = arith.extui %0 : i1 to i32
    %c0_i32_0 = arith.constant 0 : i32
    %2 = arith.cmpi ne, %1, %c0_i32_0 : i32
    scf.if %2 {
      %cst_17 = arith.constant 0.000000e+00 : f32
      %27 = vector.broadcast %cst_17 : f32 to vector<8x128xf32>
      %c0_18 = arith.constant 0 : index
      %c0_19 = arith.constant 0 : index
      %28 = vector.load %arg7[%c0_18, %c0_19] : memref<8x128xf32, #tpu.memory_space<vmem>>, vector<8x128xf32>
      tpu.vector_store %arg7[%c0_18, %c0_19], %27 {strides = array<i32>} : memref<8x128xf32, #tpu.memory_space<vmem>>, vector<8x128xf32>,
      %cst_20 = arith.constant 0.000000e+00 : f32
      %29 = vector.broadcast %cst_20 : f32 to vector<8x1xf32>
      %c0_21 = arith.constant 0 : index
      %c0_22 = arith.constant 0 : index
      %30 = vector.load %arg8[%c0_21, %c0_22] : memref<8x1xf32, #tpu.memory_space<vmem>>, vector<8x1xf32>
      tpu.vector_store %arg8[%c0_21, %c0_22], %29 {strides = array<i32>} : memref<8x1xf32, #tpu.memory_space<vmem>>, vector<8x1xf32>,
    } else {
    }
    %c0 = arith.constant 0 : index
    %c0_1 = arith.constant 0 : index
    %c0_2 = arith.constant 0 : index
    %3 = vector.load %arg2[%c0, %c0_1, %c0_2] : memref<1x128x128xf32, #tpu.memory_space<vmem>>, vector<1x128x128xf32>
    %4 = vector.shape_cast %3 : vector<1x128x128xf32> to vector<128x128xf32>
    %c0_3 = arith.constant 0 : index
    %c0_4 = arith.constant 0 : index
    %c0_5 = arith.constant 0 : index
    %5 = vector.load %arg3[%c0_3, %c0_4, %c0_5] : memref<1x1x128xi32, #tpu.memory_space<vmem>>, vector<1x1x128xi32>
    %6 = vector.shape_cast %5 : vector<1x1x128xi32> to vector<1x128xi32>
    %7 = tpu.iota {dimensions = array<i32: 0>} : vector<8x128xi32>
    %8 = vector.broadcast %6 : vector<1x128xi32> to vector<8x128xi32>
    %9 = arith.cmpi eq, %7, %8 : vector<8x128xi32>
    %c0_6 = arith.constant 0 : index
    %c0_7 = arith.constant 0 : index
    %10 = vector.load %arg7[%c0_6, %c0_7] : memref<8x128xf32, #tpu.memory_space<vmem>>, vector<8x128xf32>
    %11 = arith.extui %9 : vector<8x128xi1> to vector<8x128xi32>
    %12 = arith.sitofp %11 : vector<8x128xi32> to vector<8x128xf32>
    %13 = math.absf %4 : vector<128x128xf32>
    %cst = arith.constant dense<0.000000e+00> : vector<8x128xf32>
    %14 = tpu.matmul %12, %13, %cst {dimension_numbers = #tpu.dot_dimension_numbers<[1], [0], [0], [1], [0, 0, 1, 1], [], []>, precision = #tpu.contract_precision<fp32>} : vector<8x128xf32>, vector<128x128xf32>, vector<8x128xf32> -> vector<8x128xf32>
    %15 = arith.addf %10, %14 : vector<8x128xf32>
    %c0_8 = arith.constant 0 : index
    %c0_9 = arith.constant 0 : index
    %16 = vector.load %arg7[%c0_8, %c0_9] : memref<8x128xf32, #tpu.memory_space<vmem>>, vector<8x128xf32>
    tpu.vector_store %arg7[%c0_8, %c0_9], %15 {strides = array<i32>} : memref<8x128xf32, #tpu.memory_space<vmem>>, vector<8x128xf32>,
    %c0_10 = arith.constant 0 : index
    %c0_11 = arith.constant 0 : index
    %17 = vector.load %arg8[%c0_10, %c0_11] : memref<8x1xf32, #tpu.memory_space<vmem>>, vector<8x1xf32>
    %18 = arith.extui %9 : vector<8x128xi1> to vector<8x128xi32>
    %19 = arith.sitofp %18 : vector<8x128xi32> to vector<8x128xf32>
    %cst_12 = arith.constant dense<0.000000e+00> : vector<8xf32>
    %20 = vector.multi_reduction <add>, %19, %cst_12 [1] : vector<8x128xf32> to vector<8xf32>
    %21 = vector.shape_cast %20 : vector<8xf32> to vector<8x1xf32>
    %22 = arith.addf %17, %21 : vector<8x1xf32>
    %c0_13 = arith.constant 0 : index
    %c0_14 = arith.constant 0 : index
    %23 = vector.load %arg8[%c0_13, %c0_14] : memref<8x1xf32, #tpu.memory_space<vmem>>, vector<8x1xf32>
    tpu.vector_store %arg8[%c0_13, %c0_14], %22 {strides = array<i32>} : memref<8x1xf32, #tpu.memory_space<vmem>>, vector<8x1xf32>,
    %c0_i32_15 = arith.constant 0 : i32
    %24 = arith.cmpi eq, %arg1, %c0_i32_15 : i32
    %25 = arith.extui %24 : i1 to i32
    %c0_i32_16 = arith.constant 0 : i32
    %26 = arith.cmpi ne, %25, %c0_i32_16 : i32
    scf.if %26 {
      %c0_17 = arith.constant 0 : index
      %c0_18 = arith.constant 0 : index
      %27 = vector.load %arg7[%c0_17, %c0_18] : memref<8x128xf32, #tpu.memory_space<vmem>>, vector<8x128xf32>
      %c0_19 = arith.constant 0 : index
      %c0_20 = arith.constant 0 : index
      %28 = vector.load %arg4[%c0_19, %c0_20] : memref<8x128xf32, #tpu.memory_space<vmem>>, vector<8x128xf32>
      %29 = arith.mulf %27, %28 : vector<8x128xf32>
      %cst_21 = arith.constant dense<0.000000e+00> : vector<8xf32>
      %30 = vector.multi_reduction <add>, %29, %cst_21 [1] : vector<8x128xf32> to vector<8xf32>
      %31 = vector.shape_cast %30 : vector<8xf32> to vector<8x1xf32>
      %c0_22 = arith.constant 0 : index
      %c0_23 = arith.constant 0 : index
      %c0_24 = arith.constant 0 : index
      %32 = vector.load %arg5[%c0_22, %c0_23, %c0_24] : memref<1x8x1xf32, #tpu.memory_space<vmem>>, vector<1x8x1xf32>
      %33 = vector.shape_cast %32 : vector<1x8x1xf32> to vector<8x1xf32>
      %34 = vector.shape_cast %31 : vector<8x1xf32> to vector<1x8x1xf32>
      tpu.vector_store %arg5[%c0_22, %c0_23, %c0_24], %34 {strides = array<i32>} : memref<1x8x1xf32, #tpu.memory_space<vmem>>, vector<1x8x1xf32>,
      %c0_25 = arith.constant 0 : index
      %c0_26 = arith.constant 0 : index
      %35 = vector.load %arg8[%c0_25, %c0_26] : memref<8x1xf32, #tpu.memory_space<vmem>>, vector<8x1xf32>
      %c0_27 = arith.constant 0 : index
      %c0_28 = arith.constant 0 : index
      %c0_29 = arith.constant 0 : index
      %36 = vector.load %arg6[%c0_27, %c0_28, %c0_29] : memref<1x8x1xf32, #tpu.memory_space<vmem>>, vector<1x8x1xf32>
      %37 = vector.shape_cast %36 : vector<1x8x1xf32> to vector<8x1xf32>
      %38 = vector.shape_cast %35 : vector<8x1xf32> to vector<1x8x1xf32>
      tpu.vector_store %arg6[%c0_27, %c0_28, %c0_29], %38 {strides = array<i32>} : memref<1x8x1xf32, #tpu.memory_space<vmem>>, vector<1x8x1xf32>,
    } else {
    }
    return
  }
  func.func @transform_0(%arg0: i32, %arg1: i32) -> (i32, i32, i32) {
    %c0_i32 = arith.constant 0 : i32
    %c0_i32_0 = arith.constant 0 : i32
    return %arg0, %arg1, %c0_i32 : i32, i32, i32
  }
  func.func @transform_1(%arg0: i32, %arg1: i32) -> (i32, i32, i32) {
    %c0_i32 = arith.constant 0 : i32
    %c0_i32_0 = arith.constant 0 : i32
    return %arg0, %c0_i32, %arg1 : i32, i32, i32
  }
  func.func @transform_2(%arg0: i32, %arg1: i32) -> (i32, i32) {
    %c0_i32 = arith.constant 0 : i32
    %c0_i32_0 = arith.constant 0 : i32
    %c0_i32_1 = arith.constant 0 : i32
    return %c0_i32, %c0_i32_0 : i32, i32
  }
  func.func @transform_3(%arg0: i32, %arg1: i32) -> (i32, i32, i32) {
    %c0_i32 = arith.constant 0 : i32
    %c0_i32_0 = arith.constant 0 : i32
    %c0_i32_1 = arith.constant 0 : i32
    return %arg0, %c0_i32, %c0_i32_0 : i32, i32, i32
  }
  func.func @transform_4(%arg0: i32, %arg1: i32) -> (i32, i32, i32) {
    %c0_i32 = arith.constant 0 : i32
    %c0_i32_0 = arith.constant 0 : i32
    %c0_i32_1 = arith.constant 0 : i32
    return %arg0, %c0_i32, %c0_i32_0 : i32, i32, i32
  }
}

</mosaic_0001>

<llo_original>
// kernel: tpu_custom_call.1
$region0: #{tpu_custom_call.1}
  #allocation0 [shape = 'u32[]', space=smem, size = 0x4, offset = 0x4, fixed_abs, tag = 'smem constant byte address 0x4 - core index']
  #allocation1 [shape = 'u32[144,128]{1,0:T(1,128)}', space=vmem, size = 0x12000, scoped, tag = 'internal scratch']
  #allocation2 [shape = 'f32[8,128]{1,0:T(8,128)}', space=vmem, size = 0x1000, scoped, tag = 'scratch operand']
  #allocation3 [shape = 'f32[8,1]{1,0:T(8,128)}', space=vmem, size = 0x1000, scoped, tag = 'scratch operand']
  %s0 = inlined_call_operand.hbm [shape: f32[2,128,128], index: 0, kind: input, shape index: {}]
  %s1 = inlined_call_operand.vmem [shape: s32[2,1,128], index: 1, kind: input, shape index: {}]
  %s2 = inlined_call_operand.hbm [shape: f32[8,128], index: 2, kind: input, shape index: {}]
  %s3 = inlined_call_operand.vmem [shape: f32[2,8,1], index: 3, kind: output, shape index: {0}]
  %s4 = inlined_call_operand.vmem [shape: f32[2,8,1], index: 4, kind: output, shape index: {1}]
  %5 = xla_tuple %s3, %s4
  %s6 = sld [smem:[#allocation0]]
  $region69: #{tpu_custom_call.1} parent=0
    _
  %s8 = ssub.s32 1, %s6
  %s9 = scalar_select 0, %s8, %s6
  $region1: #{tpu_custom_call.1} parent=0
    #allocation4 [shape = 'u8[131072]{0}', space=vmem, size = 0x20000, scoped, tag = 'input window, operand 0']
    #allocation5 [shape = 's32[2]{0}', space=sflag, size = 0x8, scoped, tag = 'scoped memory for tpu_custom_call.1']
    #allocation6 [shape = 'u8[4096]{0}', space=vmem, size = 0x1000, scoped, tag = 'input window, operand 2, single buffered']
    #allocation7 [shape = 's32[1]{0}', space=sflag, size = 0x4, scoped, tag = 'scoped memory for tpu_custom_call.1']
    %10 = vsyncpa [#allocation5], 0
    %s11 = scalar_lea.sflag [#allocation5], 1
    %12 = vsyncpa %s11, 0
    %13 = vsyncpa [#allocation7], 0
    loop: start=0, step=1, limit=4
    $region2: #{tpu_custom_call.1} parent=1 // loop_pre_header
      _
    $region3: #{tpu_custom_call.1} parent=1 // loop_header
      %s15 = sphi 0, %s19
      %p16 = scmp.ge.s32.totalorder %s15, 4
      %s22 = sphi 0, %s34
      %s23 = sphi 0, %s30
      %s24 = sphi 0, %s22
      %s25 = sphi 0, %s23
      %s26 = sphi 0, %s24
      %s27 = sphi 0, %s25
      %s39 = sphi 0, %s41
      %s42 = sphi 0, %s39
      %s43 = sphi 0, %s42
      %s59 = sphi 0, %s43
      %s67 = sphi 0, %s69
      %s70 = sphi 0, %s67
      %s71 = sphi 0, %s70
      %s87 = sphi 0, %s71
      %s91 = sphi 0, %s91
      %s93 = sphi 0, %s91
      %s94 = sphi 0, %s93
      %s108 = sphi 0, %s94
      %s114 = sphi 0, %s116
      %s117 = sphi 0, %s114
      %s118 = sphi 0, %s117
      %s134 = sphi 0, %s118
      %s140 = sphi 0, %s142
      %s143 = sphi 0, %s140
      %s144 = sphi 0, %s143
      %s160 = sphi 0, %s144
    $region4: #{tpu_custom_call.1} parent=1 // loop_header_branch
      %18 = sbr.rel (%p16) target = $region8
    $region5: #{tpu_custom_call.1} parent=1 // loop_body
      %s20 = ssub.s32 %s15, 1
      %s21 = ssub.s32 %s15, 2
      %s28 = sadd.s32 1, %s23
      %p29 = scmp.ge.s32.totalorder %s28, 1
      %s30 = scalar_select %p29, 0, %s28
      %s31 = sadd.s32 1, %s22
      %s32 = scalar_select %p29, %s31, %s22
      %p33 = scmp.ge.s32.totalorder %s32, 2
      %s34 = scalar_select %p33, 0, %s32
      %s35 = ssub.s32 %s22, %s34
      %s36 = ssub.s32 %s23, %s30
      %s37 = sor.u32 %s35, %s36
      %p38 = scmp.eq.s32.totalorder %s37, 0
      %s40 = sadd.s32 %s39, 1
      %s41 = scalar_select %p38, %s39, %s40
      %p44 = pneg %p38
      %p45 = scmp.eq.s32.totalorder %s15, 1
      %p46 = por %p44, %p45
      %p47 = scmp.ne.s32.totalorder %s39, %s42
      %p48 = scmp.eq.s32.totalorder %s15, 0
      %p49 = por %p47, %p48
      %p50 = scmp.ne.s32.totalorder %s39, %s42
      %p51 = scmp.eq.s32.totalorder %s20, 1
      %p52 = por %p50, %p51
      %p53 = scmp.ne.s32.totalorder %s42, %s43
      %p54 = scmp.eq.s32.totalorder %s20, 0
      %p55 = por %p53, %p54
      %p56 = scmp.ne.s32.totalorder %s42, %s43
      %p57 = scmp.eq.s32.totalorder %s21, 1
      %p58 = por %p56, %p57
      %p60 = scmp.ne.s32.totalorder %s43, %s59
      %p61 = scmp.eq.s32.totalorder %s21, 0
      %p62 = por %p60, %p61
      %s63 = ssub.s32 %s22, %s34
      %s64 = ssub.s32 %s23, %s30
      %s65 = sor.u32 %s63, %s64
      %p66 = scmp.eq.s32.totalorder %s65, 0
      %s68 = sadd.s32 %s67, 1
      %s69 = scalar_select %p66, %s67, %s68
      %p72 = pneg %p66
      %p73 = scmp.eq.s32.totalorder %s15, 1
      %p74 = por %p72, %p73
      %p75 = scmp.ne.s32.totalorder %s67, %s70
      %p76 = scmp.eq.s32.totalorder %s15, 0
      %p77 = por %p75, %p76
      %p78 = scmp.ne.s32.totalorder %s67, %s70
      %p79 = scmp.eq.s32.totalorder %s20, 1
      %p80 = por %p78, %p79
      %p81 = scmp.ne.s32.totalorder %s70, %s71
      %p82 = scmp.eq.s32.totalorder %s20, 0
      %p83 = por %p81, %p82
      %p84 = scmp.ne.s32.totalorder %s70, %s71
      %p85 = scmp.eq.s32.totalorder %s21, 1
      %p86 = por %p84, %p85
      %p88 = scmp.ne.s32.totalorder %s71, %s87
      %p89 = scmp.eq.s32.totalorder %s21, 0
      %p90 = por %p88, %p89
      %s92 = sadd.s32 %s91, 1
      %p95 = scmp.eq.s32.totalorder %s15, 1
      %p96 = scmp.ne.s32.totalorder %s91, %s93
      %p97 = scmp.eq.s32.totalorder %s15, 0
      %p98 = por %p96, %p97
      %p99 = scmp.ne.s32.totalorder %s91, %s93
      %p100 = scmp.eq.s32.totalorder %s20, 1
      %p101 = por %p99, %p100
      %p102 = scmp.ne.s32.totalorder %s93, %s94
      %p103 = scmp.eq.s32.totalorder %s20, 0
      %p104 = por %p102, %p103
      %p105 = scmp.ne.s32.totalorder %s93, %s94
      %p106 = scmp.eq.s32.totalorder %s21, 1
      %p107 = por %p105, %p106
      %p109 = scmp.ne.s32.totalorder %s94, %s108
      %p110 = scmp.eq.s32.totalorder %s21, 0
      %p111 = por %p109, %p110
      %s112 = ssub.s32 %s22, %s34
      %p113 = scmp.eq.s32.totalorder %s112, 0
      %s115 = sadd.s32 %s114, 1
      %s116 = scalar_select %p113, %s114, %s115
      %p119 = pneg %p113
      %p120 = scmp.eq.s32.totalorder %s15, 1
      %p121 = por %p119, %p120
      %p122 = scmp.ne.s32.totalorder %s114, %s117
      %p123 = scmp.eq.s32.totalorder %s15, 0
      %p124 = por %p122, %p123
      %p125 = scmp.ne.s32.totalorder %s114, %s117
      %p126 = scmp.eq.s32.totalorder %s20, 1
      %p127 = por %p125, %p126
      %p128 = scmp.ne.s32.totalorder %s117, %s118
      %p129 = scmp.eq.s32.totalorder %s20, 0
      %p130 = por %p128, %p129
      %p131 = scmp.ne.s32.totalorder %s117, %s118
      %p132 = scmp.eq.s32.totalorder %s21, 1
      %p133 = por %p131, %p132
      %p135 = scmp.ne.s32.totalorder %s118, %s134
      %p136 = scmp.eq.s32.totalorder %s21, 0
      %p137 = por %p135, %p136
      %s138 = ssub.s32 %s22, %s34
      %p139 = scmp.eq.s32.totalorder %s138, 0
      %s141 = sadd.s32 %s140, 1
      %s142 = scalar_select %p139, %s140, %s141
      %p145 = pneg %p139
      %p146 = scmp.eq.s32.totalorder %s15, 1
      %p147 = por %p145, %p146
      %p148 = scmp.ne.s32.totalorder %s140, %s143
      %p149 = scmp.eq.s32.totalorder %s15, 0
      %p150 = por %p148, %p149
      %p151 = scmp.ne.s32.totalorder %s140, %s143
      %p152 = scmp.eq.s32.totalorder %s20, 1
      %p153 = por %p151, %p152
      %p154 = scmp.ne.s32.totalorder %s143, %s144
      %p155 = scmp.eq.s32.totalorder %s20, 0
      %p156 = por %p154, %p155
      %p157 = scmp.ne.s32.totalorder %s143, %s144
      %p158 = scmp.eq.s32.totalorder %s21, 1
      %p159 = por %p157, %p158
      %p161 = scmp.ne.s32.totalorder %s144, %s160
      %p162 = scmp.eq.s32.totalorder %s21, 0
      %p163 = por %p161, %p162
      %p164 = scmp.le.s32.totalorder 1, %s15
      %p165 = scmp.lt.s32.totalorder %s15, 3
      %p166 = pnand %p164, %p165
      %p167 = pneg %p166
      // Predicated region
      $region9: #{tpu_custom_call.1} parent=5 // pred_check
        _
      $region10: #{tpu_custom_call.1} parent=5 // pred_check_branch
        %169 = sbr.rel (%p166) target = $region12
      $region11: #{tpu_custom_call.1} parent=5 // pred_region
        %s170 = ssub.s32 %s15, 1
        // Predicated region
        $region13: #{tpu_custom_call.1} parent=11 // pred_check
          %p171 = pneg %p104
        $region14: #{tpu_custom_call.1} parent=11 // pred_check_branch
          %173 = sbr.rel (%p171) target = $region16
        $region15: #{tpu_custom_call.1} parent=11 // pred_region
          %s175 = ssub.s32 128, 128
          %176 = vsyncadd [#allocation7], %s175
          %s178 = sshll.u32 [#allocation6], 4
          %s179 = int_to_ptr.vmem [resolvable:$true] %s178
          %181 = dma.hbm_to_vmem [thread:$0]  %s2, 128, %s179, [#allocation7]
        $region16: #{tpu_custom_call.1} parent=11 // pred_fallthru
          _
      $region12: #{tpu_custom_call.1} parent=5 // pred_fallthru
        _
      %p182 = scmp.lt.s32.totalorder %s15, 2
      // Predicated region
      $region17: #{tpu_custom_call.1} parent=5 // pred_check
        %p183 = pneg %p182
      $region18: #{tpu_custom_call.1} parent=5 // pred_check_branch
        %185 = sbr.rel (%p183) target = $region20
      $region19: #{tpu_custom_call.1} parent=5 // pred_region
        // Predicated region
        $region21: #{tpu_custom_call.1} parent=19 // pred_check
          %p186 = pneg %p49
        $region22: #{tpu_custom_call.1} parent=19 // pred_check_branch
          %188 = sbr.rel (%p186) target = $region24
        $region23: #{tpu_custom_call.1} parent=19 // pred_region
          %s189 = sand.u32 %s39, 1
          %s190 = scalar_lea.sflag [#allocation5], %s189
          %s191 = sand.u32 %s39, 1
          %s192 = smul.addr %s191, 128
          %s193 = scalar_lea.vmem [#allocation4], %s192
          %s194 = smul.u32 16, %s23
          %s196 = ssub.s32 2048, 2048
          %197 = vsyncadd %s190, %s196
          %s198 = smul.addr %s22, 16
          %s199 = sadd.s32 %s194, %s198
          %s200 = smul.addr %s199, 128
          %s201 = scalar_lea.hbm %s0, %s200
          %s202 = sshll.u32 %s193, 4
          %s203 = int_to_ptr.vmem [resolvable:$true] %s202
          %208 = dma.hbm_to_vmem [thread:$0]  %s201, 2048, %s203, %s190, 128, 128, 8
        $region24: #{tpu_custom_call.1} parent=19 // pred_fallthru
          _
        // Predicated region
        $region25: #{tpu_custom_call.1} parent=19 // pred_check
          %p209 = pneg %p77
        $region26: #{tpu_custom_call.1} parent=19 // pred_check_branch
          %211 = sbr.rel (%p209) target = $region28
        $region27: #{tpu_custom_call.1} parent=19 // pred_region
          %p212 = scmp.lt.s32.totalorder %s22, 1
          %s213 = scalar_select %p212, %s22, 1
          %p214 = scmp.lt.s32.totalorder %s23, 0
          %s215 = scalar_select %p214, %s23, 0
          %s216 = sadd.s32 %s215, %s213
          %s217 = scalar_lea.vmem %s1, %s216
        $region28: #{tpu_custom_call.1} parent=19 // pred_fallthru
          _
      $region20: #{tpu_custom_call.1} parent=5 // pred_fallthru
        _
      %p218 = scmp.le.s32.totalorder 1, %s15
      %p219 = scmp.lt.s32.totalorder %s15, 3
      %p220 = pnand %p218, %p219
      %p221 = pneg %p220
      // Predicated region
      $region29: #{tpu_custom_call.1} parent=5 // pred_check
        _
      $region30: #{tpu_custom_call.1} parent=5 // pred_check_branch
        %223 = sbr.rel (%p220) target = $region32
      $region31: #{tpu_custom_call.1} parent=5 // pred_region
        %s224 = ssub.s32 %s15, 1
        %s225 = sand.u32 %s42, 1
        %s226 = scalar_lea.sflag [#allocation5], %s225
        %s227 = sand.u32 %s42, 1
        %s228 = smul.addr %s227, 128
        %s229 = scalar_lea.vmem [#allocation4], %s228
        // Predicated region
        $region33: #{tpu_custom_call.1} parent=31 // pred_check
          %p230 = pneg %p55
        $region34: #{tpu_custom_call.1} parent=31 // pred_check_branch
          %232 = sbr.rel (%p230) target = $region36
        $region35: #{tpu_custom_call.1} parent=31 // pred_region
          %233 = dma.done %s226, 2048
        $region36: #{tpu_custom_call.1} parent=31 // pred_fallthru
          _
        // Predicated region
        $region37: #{tpu_custom_call.1} parent=31 // pred_check
          %p234 = pneg %p104
        $region38: #{tpu_custom_call.1} parent=31 // pred_check_branch
          %236 = sbr.rel (%p234) target = $region40
        $region39: #{tpu_custom_call.1} parent=31 // pred_region
          %237 = dma.done [#allocation7], 128
        $region40: #{tpu_custom_call.1} parent=31 // pred_fallthru
          _
        %s238 = sand.u32 %s42, 1
        %s239 = scalar_lea.sflag [#allocation5], %s238
        %s240 = sand.u32 %s42, 1
        %s241 = smul.addr %s240, 128
        %s242 = scalar_lea.vmem [#allocation4], %s241
        %p243 = pneg %p55
        %p244 = pneg %p52
        %p245 = scmp.lt.s32.totalorder %s24, 1
        %s246 = scalar_select %p245, %s24, 1
        %p247 = scmp.lt.s32.totalorder %s25, 0
        %s248 = scalar_select %p247, %s25, 0
        %s249 = sadd.s32 %s248, %s246
        %s250 = scalar_lea.vmem %s1, %s249
        %p251 = pneg %p83
        %p252 = pneg %p80
        %p253 = pneg %p104
        %p254 = pneg %p101
        %p255 = pneg %p130
        %p256 = pneg %p127
        %p257 = scmp.lt.s32.totalorder %s24, 1
        %s258 = scalar_select %p257, %s24, 1
        %s259 = smul.addr %s258, 8
        %s260 = scalar_lea.vmem %s3, %s259
        %p261 = pneg %p156
        %p262 = pneg %p153
        %p263 = scmp.lt.s32.totalorder %s24, 1
        %s264 = scalar_select %p263, %s24, 1
        %s265 = smul.addr %s264, 8
        %s266 = scalar_lea.vmem %s4, %s265
        %s267 = smul.u32 16, %s25
        %p268 = scmp.lt.s32.totalorder %s24, 1
        %s269 = scalar_select %p268, %s24, 1
        %p270 = scmp.lt.s32.totalorder %s25, 0
        %s271 = scalar_select %p270, %s25, 0
        %s272 = sadd.s32 %s271, %s269
        %s273 = scalar_lea.vmem %s1, %s272
        %p274 = scmp.lt.s32.totalorder %s24, 1
        %s275 = scalar_select %p274, %s24, 1
        %s276 = smul.addr %s275, 8
        %s277 = scalar_lea.vmem %s3, %s276
        %p278 = scmp.lt.s32.totalorder %s24, 1
        %s279 = scalar_select %p278, %s24, 1
        %s280 = smul.addr %s279, 8
        %s281 = scalar_lea.vmem %s4, %s280
        %p282 = scmp.eq.s32.totalorder %s25, 0
        // Predicated region
        $region41: #{tpu_custom_call.1} parent=31 // pred_check
          %p283 = pneg %p282
        $region42: #{tpu_custom_call.1} parent=31 // pred_check_branch
          %285 = sbr.rel (%p283) target = $region44
        $region43: #{tpu_custom_call.1} parent=31 // pred_region
          %286 = vst [vmem:[#allocation2] sm:$0xff] 0.0
          %vm287 = vcmask 7168
          %288 = vst.msk [vmem:[#allocation3] sm:$0xff] %vm287, 0.0
        $region44: #{tpu_custom_call.1} parent=31 // pred_fallthru
          _
        %v289 = vld [vmem:[%s229] sm:$0xff]
        %v290 = vld [vmem:[%s229 + $0x8] sm:$0xff]
        %v291 = vld [vmem:[%s229 + $0x10] sm:$0xff]
        %v292 = vld [vmem:[%s229 + $0x18] sm:$0xff]
        %v293 = vld [vmem:[%s229 + $0x20] sm:$0xff]
        %v294 = vld [vmem:[%s229 + $0x28] sm:$0xff]
        %v295 = vld [vmem:[%s229 + $0x30] sm:$0xff]
        %v296 = vld [vmem:[%s229 + $0x38] sm:$0xff]
        %v297 = vld [vmem:[%s229 + $0x40] sm:$0xff]
        %v298 = vld [vmem:[%s229 + $0x48] sm:$0xff]
        %v299 = vld [vmem:[%s229 + $0x50] sm:$0xff]
        %v300 = vld [vmem:[%s229 + $0x58] sm:$0xff]
        %v301 = vld [vmem:[%s229 + $0x60] sm:$0xff]
        %v302 = vld [vmem:[%s229 + $0x68] sm:$0xff]
        %v303 = vld [vmem:[%s229 + $0x70] sm:$0xff]
        %v304 = vld [vmem:[%s229 + $0x78] sm:$0xff]
        %v305 = vld [vmem:[%s273] sm:$0x1]
        %v306 = vlaneseq
        %v307 = vshrl.u32 %v306, 7
        %v308 = vlaneseq
        %v309 = vshrl.u32 %v308, 7
        %v310 = vsub.s32 0, %v309
        %v311 = vrot.slane %v305, %v310
        %vm312 = vcmp.eq.s32.totalorder %v307, %v311
        %v313 = vld [vmem:[#allocation2] sm:$0xff]
        %v314 = vsel %vm312, 1, 0
        %v315 = vcvt.s32.f32 %v314
        %v316 = vand.u32 2147483647, %v289
        %v317 = vand.u32 2147483647, %v290
        %v318 = vand.u32 2147483647, %v291
        %v319 = vand.u32 2147483647, %v292
        %v320 = vand.u32 2147483647, %v293
        %v321 = vand.u32 2147483647, %v294
        %v322 = vand.u32 2147483647, %v295
        %v323 = vand.u32 2147483647, %v296
        %v324 = vand.u32 2147483647, %v297
        %v325 = vand.u32 2147483647, %v298
        %v326 = vand.u32 2147483647, %v299
        %v327 = vand.u32 2147483647, %v300
        %v328 = vand.u32 2147483647, %v301
        %v329 = vand.u32 2147483647, %v302
        %v330 = vand.u32 2147483647, %v303
        %v331 = vand.u32 2147483647, %v304
        %332 = vmatprep.subr.mxu0 0.0
        %v333 = vand.u32 %v316, 4294901760
        %334 = vmatpush1.msra.mxu0 %v333
        %335 = vmatprep.subr.mxu0 0.0
        %v336 = vand.u32 %v317, 4294901760
        %337 = vmatpush1.msra.mxu0 %v336
        %338 = vmatprep.subr.mxu0 0.0
        %v339 = vand.u32 %v318, 4294901760
        %340 = vmatpush1.msra.mxu0 %v339
        %341 = vmatprep.subr.mxu0 0.0
        %v342 = vand.u32 %v319, 4294901760
        %343 = vmatpush1.msra.mxu0 %v342
        %344 = vmatprep.subr.mxu0 0.0
        %v345 = vand.u32 %v320, 4294901760
        %346 = vmatpush1.msra.mxu0 %v345
        %347 = vmatprep.subr.mxu0 0.0
        %v348 = vand.u32 %v321, 4294901760
        %349 = vmatpush1.msra.mxu0 %v348
        %350 = vmatprep.subr.mxu0 0.0
        %v351 = vand.u32 %v322, 4294901760
        %352 = vmatpush1.msra.mxu0 %v351
        %353 = vmatprep.subr.mxu0 0.0
        %v354 = vand.u32 %v323, 4294901760
        %355 = vmatpush1.msra.mxu0 %v354
        %356 = vmatprep.subr.mxu0 0.0
        %v357 = vand.u32 %v324, 4294901760
        %358 = vmatpush1.msra.mxu0 %v357
        %359 = vmatprep.subr.mxu0 0.0
        %v360 = vand.u32 %v325, 4294901760
        %361 = vmatpush1.msra.mxu0 %v360
        %362 = vmatprep.subr.mxu0 0.0
        %v363 = vand.u32 %v326, 4294901760
        %364 = vmatpush1.msra.mxu0 %v363
        %365 = vmatprep.subr.mxu0 0.0
        %v366 = vand.u32 %v327, 4294901760
        %367 = vmatpush1.msra.mxu0 %v366
        %368 = vmatprep.subr.mxu0 0.0
        %v369 = vand.u32 %v328, 4294901760
        %370 = vmatpush1.msra.mxu0 %v369
        %371 = vmatprep.subr.mxu0 0.0
        %v372 = vand.u32 %v329, 4294901760
        %373 = vmatpush1.msra.mxu0 %v372
        %374 = vmatprep.subr.mxu0 0.0
        %v375 = vand.u32 %v330, 4294901760
        %376 = vmatpush1.msra.mxu0 %v375
        %377 = vmatprep.subr.mxu0 0.0
        %v378 = vand.u32 %v331, 4294901760
        %379 = vmatpush1.msra.mxu0 %v378
        %380 = vmatprep.subr.mxu0 0.0
        %381 = vmatpush1.msra.mxu0 0.0
        %382 = vmatprep.subr.mxu0 0.0
        %383 = vmatpush1.msra.mxu0 0.0
        %384 = vmatprep.subr.mxu0 0.0
        %385 = vmatpush1.msra.mxu0 0.0
        %386 = vmatprep.subr.mxu0 0.0
        %387 = vmatpush1.msra.mxu0 0.0
        %388 = vmatprep.subr.mxu0 0.0
        %389 = vmatpush1.msra.mxu0 0.0
        %390 = vmatprep.subr.mxu0 0.0
        %391 = vmatpush1.msra.mxu0 0.0
        %392 = vmatprep.subr.mxu0 0.0
        %393 = vmatpush1.msra.mxu0 0.0
        %394 = vmatprep.subr.mxu0 0.0
        %395 = vmatpush1.msra.mxu0 0.0
        %396 = vmatprep.subr.mxu0 0.0
        %397 = vmatpush1.msra.mxu0 0.0
        %398 = vmatprep.subr.mxu0 0.0
        %399 = vmatpush1.msra.mxu0 0.0
        %400 = vmatprep.subr.mxu0 0.0
        %401 = vmatpush1.msra.mxu0 0.0
        %402 = vmatprep.subr.mxu0 0.0
        %403 = vmatpush1.msra.mxu0 0.0
        %404 = vmatprep.subr.mxu0 0.0
        %405 = vmatpush1.msra.mxu0 0.0
        %406 = vmatprep.subr.mxu0 0.0
        %407 = vmatpush1.msra.mxu0 0.0
        %408 = vmatprep.subr.mxu0 0.0
        %409 = vmatpush1.msra.mxu0 0.0
        %410 = vmatprep.subr.mxu0 0.0
        %411 = vmatpush1.msra.mxu0 0.0
        %412 = vmatprep.mubr.f32.mxu0 0.0
        %v413 = vand.u32 %v315, 4294901760
        %v414 = vsub.f32 %v315, %v413
        %v415 = vand.u32 %v414, 4294901760
        %v416 = vsub.f32 %v414, %v415
        %v417 = vand.u32 %v416, 4294901760
        %418 = vmatmul.mubr.f32.gmra.mrb[0].mxu0 %v417
        %v419 = vpop.f32.mrb[0].mxu0
        %v420 = vadd.f32 0.0, %v419
        %v421 = vpop.f32.mrb[0].mxu0
        %422 = vdwg.mxu0
        %423 = vmatprep.subr.mxu0 0.0
        %v424 = vand.u32 %v316, 4294901760
        %v425 = vsub.f32 %v316, %v424
        %v426 = vand.u32 %v425, 4294901760
        %v427 = vsub.f32 %v425, %v426
        %v428 = vand.u32 %v427, 4294901760
        %429 = vmatpush1.msra.mxu0 %v428
        %430 = vmatprep.subr.mxu0 0.0
        %v431 = vand.u32 %v317, 4294901760
        %v432 = vsub.f32 %v317, %v431
        %v433 = vand.u32 %v432, 4294901760
        %v434 = vsub.f32 %v432, %v433
        %v435 = vand.u32 %v434, 4294901760
        %436 = vmatpush1.msra.mxu0 %v435
        %437 = vmatprep.subr.mxu0 0.0
        %v438 = vand.u32 %v318, 4294901760
        %v439 = vsub.f32 %v318, %v438
        %v440 = vand.u32 %v439, 4294901760
        %v441 = vsub.f32 %v439, %v440
        %v442 = vand.u32 %v441, 4294901760
        %443 = vmatpush1.msra.mxu0 %v442
        %444 = vmatprep.subr.mxu0 0.0
        %v445 = vand.u32 %v319, 4294901760
        %v446 = vsub.f32 %v319, %v445
        %v447 = vand.u32 %v446, 4294901760
        %v448 = vsub.f32 %v446, %v447
        %v449 = vand.u32 %v448, 4294901760
        %450 = vmatpush1.msra.mxu0 %v449
        %451 = vmatprep.subr.mxu0 0.0
        %v452 = vand.u32 %v320, 4294901760
        %v453 = vsub.f32 %v320, %v452
        %v454 = vand.u32 %v453, 4294901760
        %v455 = vsub.f32 %v453, %v454
        %v456 = vand.u32 %v455, 4294901760
        %457 = vmatpush1.msra.mxu0 %v456
        %458 = vmatprep.subr.mxu0 0.0
        %v459 = vand.u32 %v321, 4294901760
        %v460 = vsub.f32 %v321, %v459
        %v461 = vand.u32 %v460, 4294901760
        %v462 = vsub.f32 %v460, %v461
        %v463 = vand.u32 %v462, 4294901760
        %464 = vmatpush1.msra.mxu0 %v463
        %465 = vmatprep.subr.mxu0 0.0
        %v466 = vand.u32 %v322, 4294901760
        %v467 = vsub.f32 %v322, %v466
        %v468 = vand.u32 %v467, 4294901760
        %v469 = vsub.f32 %v467, %v468
        %v470 = vand.u32 %v469, 4294901760
        %471 = vmatpush1.msra.mxu0 %v470
        %472 = vmatprep.subr.mxu0 0.0
        %v473 = vand.u32 %v323, 4294901760
        %v474 = vsub.f32 %v323, %v473
        %v475 = vand.u32 %v474, 4294901760
        %v476 = vsub.f32 %v474, %v475
        %v477 = vand.u32 %v476, 4294901760
        %478 = vmatpush1.msra.mxu0 %v477
        %479 = vmatprep.subr.mxu0 0.0
        %v480 = vand.u32 %v324, 4294901760
        %v481 = vsub.f32 %v324, %v480
        %v482 = vand.u32 %v481, 4294901760
        %v483 = vsub.f32 %v481, %v482
        %v484 = vand.u32 %v483, 4294901760
        %485 = vmatpush1.msra.mxu0 %v484
        %486 = vmatprep.subr.mxu0 0.0
        %v487 = vand.u32 %v325, 4294901760
        %v488 = vsub.f32 %v325, %v487
        %v489 = vand.u32 %v488, 4294901760
        %v490 = vsub.f32 %v488, %v489
        %v491 = vand.u32 %v490, 4294901760
        %492 = vmatpush1.msra.mxu0 %v491
        %493 = vmatprep.subr.mxu0 0.0
        %v494 = vand.u32 %v326, 4294901760
        %v495 = vsub.f32 %v326, %v494
        %v496 = vand.u32 %v495, 4294901760
        %v497 = vsub.f32 %v495, %v496
        %v498 = vand.u32 %v497, 4294901760
        %499 = vmatpush1.msra.mxu0 %v498
        %500 = vmatprep.subr.mxu0 0.0
        %v501 = vand.u32 %v327, 4294901760
        %v502 = vsub.f32 %v327, %v501
        %v503 = vand.u32 %v502, 4294901760
        %v504 = vsub.f32 %v502, %v503
        %v505 = vand.u32 %v504, 4294901760
        %506 = vmatpush1.msra.mxu0 %v505
        %507 = vmatprep.subr.mxu0 0.0
        %v508 = vand.u32 %v328, 4294901760
        %v509 = vsub.f32 %v328, %v508
        %v510 = vand.u32 %v509, 4294901760
        %v511 = vsub.f32 %v509, %v510
        %v512 = vand.u32 %v511, 4294901760
        %513 = vmatpush1.msra.mxu0 %v512
        %514 = vmatprep.subr.mxu0 0.0
        %v515 = vand.u32 %v329, 4294901760
        %v516 = vsub.f32 %v329, %v515
        %v517 = vand.u32 %v516, 4294901760
        %v518 = vsub.f32 %v516, %v517
        %v519 = vand.u32 %v518, 4294901760
        %520 = vmatpush1.msra.mxu0 %v519
        %521 = vmatprep.subr.mxu0 0.0
        %v522 = vand.u32 %v330, 4294901760
        %v523 = vsub.f32 %v330, %v522
        %v524 = vand.u32 %v523, 4294901760
        %v525 = vsub.f32 %v523, %v524
        %v526 = vand.u32 %v525, 4294901760
        %527 = vmatpush1.msra.mxu0 %v526
        %528 = vmatprep.subr.mxu0 0.0
        %v529 = vand.u32 %v331, 4294901760
        %v530 = vsub.f32 %v331, %v529
        %v531 = vand.u32 %v530, 4294901760
        %v532 = vsub.f32 %v530, %v531
        %v533 = vand.u32 %v532, 4294901760
        %534 = vmatpush1.msra.mxu0 %v533
        %535 = vmatprep.subr.mxu0 0.0
        %536 = vmatpush1.msra.mxu0 0.0
        %537 = vmatprep.subr.mxu0 0.0
        %538 = vmatpush1.msra.mxu0 0.0
        %539 = vmatprep.subr.mxu0 0.0
        %540 = vmatpush1.msra.mxu0 0.0
        %541 = vmatprep.subr.mxu0 0.0
        %542 = vmatpush1.msra.mxu0 0.0
        %543 = vmatprep.subr.mxu0 0.0
        %544 = vmatpush1.msra.mxu0 0.0
        %545 = vmatprep.subr.mxu0 0.0
        %546 = vmatpush1.msra.mxu0 0.0
        %547 = vmatprep.subr.mxu0 0.0
        %548 = vmatpush1.msra.mxu0 0.0
        %549 = vmatprep.subr.mxu0 0.0
        %550 = vmatpush1.msra.mxu0 0.0
        %551 = vmatprep.subr.mxu0 0.0
        %552 = vmatpush1.msra.mxu0 0.0
        %553 = vmatprep.subr.mxu0 0.0
        %554 = vmatpush1.msra.mxu0 0.0
        %555 = vmatprep.subr.mxu0 0.0
        %556 = vmatpush1.msra.mxu0 0.0
        %557 = vmatprep.subr.mxu0 0.0
        %558 = vmatpush1.msra.mxu0 0.0
        %559 = vmatprep.subr.mxu0 0.0
        %560 = vmatpush1.msra.mxu0 0.0
        %561 = vmatprep.subr.mxu0 0.0
        %562 = vmatpush1.msra.mxu0 0.0
        %563 = vmatprep.subr.mxu0 0.0
        %564 = vmatpush1.msra.mxu0 0.0
        %565 = vmatprep.subr.mxu0 0.0
        %566 = vmatpush1.msra.mxu0 0.0
        %567 = vmatprep.mubr.f32.mxu0 0.0
        %v568 = vand.u32 %v315, 4294901760
        %569 = vmatmul.mubr.f32.gmra.mrb[0].mxu0 %v568
        %v570 = vpop.f32.mrb[0].mxu0
        %v571 = vadd.f32 %v420, %v570
        %v572 = vpop.f32.mrb[0].mxu0
        %573 = vdwg.mxu0
        %574 = vmatprep.subr.mxu0 0.0
        %v575 = vand.u32 %v316, 4294901760
        %v576 = vsub.f32 %v316, %v575
        %577 = vmatpush1.msra.mxu0 %v576
        %578 = vmatprep.subr.mxu0 0.0
        %v579 = vand.u32 %v317, 4294901760
        %v580 = vsub.f32 %v317, %v579
        %581 = vmatpush1.msra.mxu0 %v580
        %582 = vmatprep.subr.mxu0 0.0
        %v583 = vand.u32 %v318, 4294901760
        %v584 = vsub.f32 %v318, %v583
        %585 = vmatpush1.msra.mxu0 %v584
        %586 = vmatprep.subr.mxu0 0.0
        %v587 = vand.u32 %v319, 4294901760
        %v588 = vsub.f32 %v319, %v587
        %589 = vmatpush1.msra.mxu0 %v588
        %590 = vmatprep.subr.mxu0 0.0
        %v591 = vand.u32 %v320, 4294901760
        %v592 = vsub.f32 %v320, %v591
        %593 = vmatpush1.msra.mxu0 %v592
        %594 = vmatprep.subr.mxu0 0.0
        %v595 = vand.u32 %v321, 4294901760
        %v596 = vsub.f32 %v321, %v595
        %597 = vmatpush1.msra.mxu0 %v596
        %598 = vmatprep.subr.mxu0 0.0
        %v599 = vand.u32 %v322, 4294901760
        %v600 = vsub.f32 %v322, %v599
        %601 = vmatpush1.msra.mxu0 %v600
        %602 = vmatprep.subr.mxu0 0.0
        %v603 = vand.u32 %v323, 4294901760
        %v604 = vsub.f32 %v323, %v603
        %605 = vmatpush1.msra.mxu0 %v604
        %606 = vmatprep.subr.mxu0 0.0
        %v607 = vand.u32 %v324, 4294901760
        %v608 = vsub.f32 %v324, %v607
        %609 = vmatpush1.msra.mxu0 %v608
        %610 = vmatprep.subr.mxu0 0.0
        %v611 = vand.u32 %v325, 4294901760
        %v612 = vsub.f32 %v325, %v611
        %613 = vmatpush1.msra.mxu0 %v612
        %614 = vmatprep.subr.mxu0 0.0
        %v615 = vand.u32 %v326, 4294901760
        %v616 = vsub.f32 %v326, %v615
        %617 = vmatpush1.msra.mxu0 %v616
        %618 = vmatprep.subr.mxu0 0.0
        %v619 = vand.u32 %v327, 4294901760
        %v620 = vsub.f32 %v327, %v619
        %621 = vmatpush1.msra.mxu0 %v620
        %622 = vmatprep.subr.mxu0 0.0
        %v623 = vand.u32 %v328, 4294901760
        %v624 = vsub.f32 %v328, %v623
        %625 = vmatpush1.msra.mxu0 %v624
        %626 = vmatprep.subr.mxu0 0.0
        %v627 = vand.u32 %v329, 4294901760
        %v628 = vsub.f32 %v329, %v627
        %629 = vmatpush1.msra.mxu0 %v628
        %630 = vmatprep.subr.mxu0 0.0
        %v631 = vand.u32 %v330, 4294901760
        %v632 = vsub.f32 %v330, %v631
        %633 = vmatpush1.msra.mxu0 %v632
        %634 = vmatprep.subr.mxu0 0.0
        %v635 = vand.u32 %v331, 4294901760
        %v636 = vsub.f32 %v331, %v635
        %637 = vmatpush1.msra.mxu0 %v636
        %638 = vmatprep.subr.mxu0 0.0
        %639 = vmatpush1.msra.mxu0 0.0
        %640 = vmatprep.subr.mxu0 0.0
        %641 = vmatpush1.msra.mxu0 0.0
        %642 = vmatprep.subr.mxu0 0.0
        %643 = vmatpush1.msra.mxu0 0.0
        %644 = vmatprep.subr.mxu0 0.0
        %645 = vmatpush1.msra.mxu0 0.0
        %646 = vmatprep.subr.mxu0 0.0
        %647 = vmatpush1.msra.mxu0 0.0
        %648 = vmatprep.subr.mxu0 0.0
        %649 = vmatpush1.msra.mxu0 0.0
        %650 = vmatprep.subr.mxu0 0.0
        %651 = vmatpush1.msra.mxu0 0.0
        %652 = vmatprep.subr.mxu0 0.0
        %653 = vmatpush1.msra.mxu0 0.0
        %654 = vmatprep.subr.mxu0 0.0
        %655 = vmatpush1.msra.mxu0 0.0
        %656 = vmatprep.subr.mxu0 0.0
        %657 = vmatpush1.msra.mxu0 0.0
        %658 = vmatprep.subr.mxu0 0.0
        %659 = vmatpush1.msra.mxu0 0.0
        %660 = vmatprep.subr.mxu0 0.0
        %661 = vmatpush1.msra.mxu0 0.0
        %662 = vmatprep.subr.mxu0 0.0
        %663 = vmatpush1.msra.mxu0 0.0
        %664 = vmatprep.subr.mxu0 0.0
        %665 = vmatpush1.msra.mxu0 0.0
        %666 = vmatprep.subr.mxu0 0.0
        %667 = vmatpush1.msra.mxu0 0.0
        %668 = vmatprep.subr.mxu0 0.0
        %669 = vmatpush1.msra.mxu0 0.0
        %670 = vmatprep.mubr.f32.mxu0 0.0
        %v671 = vand.u32 %v315, 4294901760
        %v672 = vsub.f32 %v315, %v671
        %673 = vmatmul.mubr.f32.gmra.mrb[0].mxu0 %v672
        %v674 = vpop.f32.mrb[0].mxu0
        %v675 = vadd.f32 %v571, %v674
        %v676 = vpop.f32.mrb[0].mxu0
        %677 = vdwg.mxu0
        %678 = vmatprep.subr.mxu0 0.0
        %v679 = vand.u32 %v316, 4294901760
        %680 = vmatpush1.msra.mxu0 %v679
        %681 = vmatprep.subr.mxu0 0.0
        %v682 = vand.u32 %v317, 4294901760
        %683 = vmatpush1.msra.mxu0 %v682
        %684 = vmatprep.subr.mxu0 0.0
        %v685 = vand.u32 %v318, 4294901760
        %686 = vmatpush1.msra.mxu0 %v685
        %687 = vmatprep.subr.mxu0 0.0
        %v688 = vand.u32 %v319, 4294901760
        %689 = vmatpush1.msra.mxu0 %v688
        %690 = vmatprep.subr.mxu0 0.0
        %v691 = vand.u32 %v320, 4294901760
        %692 = vmatpush1.msra.mxu0 %v691
        %693 = vmatprep.subr.mxu0 0.0
        %v694 = vand.u32 %v321, 4294901760
        %695 = vmatpush1.msra.mxu0 %v694
        %696 = vmatprep.subr.mxu0 0.0
        %v697 = vand.u32 %v322, 4294901760
        %698 = vmatpush1.msra.mxu0 %v697
        %699 = vmatprep.subr.mxu0 0.0
        %v700 = vand.u32 %v323, 4294901760
        %701 = vmatpush1.msra.mxu0 %v700
        %702 = vmatprep.subr.mxu0 0.0
        %v703 = vand.u32 %v324, 4294901760
        %704 = vmatpush1.msra.mxu0 %v703
        %705 = vmatprep.subr.mxu0 0.0
        %v706 = vand.u32 %v325, 4294901760
        %707 = vmatpush1.msra.mxu0 %v706
        %708 = vmatprep.subr.mxu0 0.0
        %v709 = vand.u32 %v326, 4294901760
        %710 = vmatpush1.msra.mxu0 %v709
        %711 = vmatprep.subr.mxu0 0.0
        %v712 = vand.u32 %v327, 4294901760
        %713 = vmatpush1.msra.mxu0 %v712
        %714 = vmatprep.subr.mxu0 0.0
        %v715 = vand.u32 %v328, 4294901760
        %716 = vmatpush1.msra.mxu0 %v715
        %717 = vmatprep.subr.mxu0 0.0
        %v718 = vand.u32 %v329, 4294901760
        %719 = vmatpush1.msra.mxu0 %v718
        %720 = vmatprep.subr.mxu0 0.0
        %v721 = vand.u32 %v330, 4294901760
        %722 = vmatpush1.msra.mxu0 %v721
        %723 = vmatprep.subr.mxu0 0.0
        %v724 = vand.u32 %v331, 4294901760
        %725 = vmatpush1.msra.mxu0 %v724
        %726 = vmatprep.subr.mxu0 0.0
        %727 = vmatpush1.msra.mxu0 0.0
        %728 = vmatprep.subr.mxu0 0.0
        %729 = vmatpush1.msra.mxu0 0.0
        %730 = vmatprep.subr.mxu0 0.0
        %731 = vmatpush1.msra.mxu0 0.0
        %732 = vmatprep.subr.mxu0 0.0
        %733 = vmatpush1.msra.mxu0 0.0
        %734 = vmatprep.subr.mxu0 0.0
        %735 = vmatpush1.msra.mxu0 0.0
        %736 = vmatprep.subr.mxu0 0.0
        %737 = vmatpush1.msra.mxu0 0.0
        %738 = vmatprep.subr.mxu0 0.0
        %739 = vmatpush1.msra.mxu0 0.0
        %740 = vmatprep.subr.mxu0 0.0
        %741 = vmatpush1.msra.mxu0 0.0
        %742 = vmatprep.subr.mxu0 0.0
        %743 = vmatpush1.msra.mxu0 0.0
        %744 = vmatprep.subr.mxu0 0.0
        %745 = vmatpush1.msra.mxu0 0.0
        %746 = vmatprep.subr.mxu0 0.0
        %747 = vmatpush1.msra.mxu0 0.0
        %748 = vmatprep.subr.mxu0 0.0
        %749 = vmatpush1.msra.mxu0 0.0
        %750 = vmatprep.subr.mxu0 0.0
        %751 = vmatpush1.msra.mxu0 0.0
        %752 = vmatprep.subr.mxu0 0.0
        %753 = vmatpush1.msra.mxu0 0.0
        %754 = vmatprep.subr.mxu0 0.0
        %755 = vmatpush1.msra.mxu0 0.0
        %756 = vmatprep.subr.mxu0 0.0
        %757 = vmatpush1.msra.mxu0 0.0
        %758 = vmatprep.mubr.f32.mxu0 0.0
        %v759 = vand.u32 %v315, 4294901760
        %v760 = vsub.f32 %v315, %v759
        %v761 = vand.u32 %v760, 4294901760
        %762 = vmatmul.mubr.f32.gmra.mrb[0].mxu0 %v761
        %v763 = vpop.f32.mrb[0].mxu0
        %v764 = vadd.f32 %v675, %v763
        %v765 = vpop.f32.mrb[0].mxu0
        %766 = vdwg.mxu0
        %767 = vmatprep.subr.mxu0 0.0
        %v768 = vand.u32 %v316, 4294901760
        %v769 = vsub.f32 %v316, %v768
        %v770 = vand.u32 %v769, 4294901760
        %771 = vmatpush1.msra.mxu0 %v770
        %772 = vmatprep.subr.mxu0 0.0
        %v773 = vand.u32 %v317, 4294901760
        %v774 = vsub.f32 %v317, %v773
        %v775 = vand.u32 %v774, 4294901760
        %776 = vmatpush1.msra.mxu0 %v775
        %777 = vmatprep.subr.mxu0 0.0
        %v778 = vand.u32 %v318, 4294901760
        %v779 = vsub.f32 %v318, %v778
        %v780 = vand.u32 %v779, 4294901760
        %781 = vmatpush1.msra.mxu0 %v780
        %782 = vmatprep.subr.mxu0 0.0
        %v783 = vand.u32 %v319, 4294901760
        %v784 = vsub.f32 %v319, %v783
        %v785 = vand.u32 %v784, 4294901760
        %786 = vmatpush1.msra.mxu0 %v785
        %787 = vmatprep.subr.mxu0 0.0
        %v788 = vand.u32 %v320, 4294901760
        %v789 = vsub.f32 %v320, %v788
        %v790 = vand.u32 %v789, 4294901760
        %791 = vmatpush1.msra.mxu0 %v790
        %792 = vmatprep.subr.mxu0 0.0
        %v793 = vand.u32 %v321, 4294901760
        %v794 = vsub.f32 %v321, %v793
        %v795 = vand.u32 %v794, 4294901760
        %796 = vmatpush1.msra.mxu0 %v795
        %797 = vmatprep.subr.mxu0 0.0
        %v798 = vand.u32 %v322, 4294901760
        %v799 = vsub.f32 %v322, %v798
        %v800 = vand.u32 %v799, 4294901760
        %801 = vmatpush1.msra.mxu0 %v800
        %802 = vmatprep.subr.mxu0 0.0
        %v803 = vand.u32 %v323, 4294901760
        %v804 = vsub.f32 %v323, %v803
        %v805 = vand.u32 %v804, 4294901760
        %806 = vmatpush1.msra.mxu0 %v805
        %807 = vmatprep.subr.mxu0 0.0
        %v808 = vand.u32 %v324, 4294901760
        %v809 = vsub.f32 %v324, %v808
        %v810 = vand.u32 %v809, 4294901760
        %811 = vmatpush1.msra.mxu0 %v810
        %812 = vmatprep.subr.mxu0 0.0
        %v813 = vand.u32 %v325, 4294901760
        %v814 = vsub.f32 %v325, %v813
        %v815 = vand.u32 %v814, 4294901760
        %816 = vmatpush1.msra.mxu0 %v815
        %817 = vmatprep.subr.mxu0 0.0
        %v818 = vand.u32 %v326, 4294901760
        %v819 = vsub.f32 %v326, %v818
        %v820 = vand.u32 %v819, 4294901760
        %821 = vmatpush1.msra.mxu0 %v820
        %822 = vmatprep.subr.mxu0 0.0
        %v823 = vand.u32 %v327, 4294901760
        %v824 = vsub.f32 %v327, %v823
        %v825 = vand.u32 %v824, 4294901760
        %826 = vmatpush1.msra.mxu0 %v825
        %827 = vmatprep.subr.mxu0 0.0
        %v828 = vand.u32 %v328, 4294901760
        %v829 = vsub.f32 %v328, %v828
        %v830 = vand.u32 %v829, 4294901760
        %831 = vmatpush1.msra.mxu0 %v830
        %832 = vmatprep.subr.mxu0 0.0
        %v833 = vand.u32 %v329, 4294901760
        %v834 = vsub.f32 %v329, %v833
        %v835 = vand.u32 %v834, 4294901760
        %836 = vmatpush1.msra.mxu0 %v835
        %837 = vmatprep.subr.mxu0 0.0
        %v838 = vand.u32 %v330, 4294901760
        %v839 = vsub.f32 %v330, %v838
        %v840 = vand.u32 %v839, 4294901760
        %841 = vmatpush1.msra.mxu0 %v840
        %842 = vmatprep.subr.mxu0 0.0
        %v843 = vand.u32 %v331, 4294901760
        %v844 = vsub.f32 %v331, %v843
        %v845 = vand.u32 %v844, 4294901760
        %846 = vmatpush1.msra.mxu0 %v845
        %847 = vmatprep.subr.mxu0 0.0
        %848 = vmatpush1.msra.mxu0 0.0
        %849 = vmatprep.subr.mxu0 0.0
        %850 = vmatpush1.msra.mxu0 0.0
        %851 = vmatprep.subr.mxu0 0.0
        %852 = vmatpush1.msra.mxu0 0.0
        %853 = vmatprep.subr.mxu0 0.0
        %854 = vmatpush1.msra.mxu0 0.0
        %855 = vmatprep.subr.mxu0 0.0
        %856 = vmatpush1.msra.mxu0 0.0
        %857 = vmatprep.subr.mxu0 0.0
        %858 = vmatpush1.msra.mxu0 0.0
        %859 = vmatprep.subr.mxu0 0.0
        %860 = vmatpush1.msra.mxu0 0.0
        %861 = vmatprep.subr.mxu0 0.0
        %862 = vmatpush1.msra.mxu0 0.0
        %863 = vmatprep.subr.mxu0 0.0
        %864 = vmatpush1.msra.mxu0 0.0
        %865 = vmatprep.subr.mxu0 0.0
        %866 = vmatpush1.msra.mxu0 0.0
        %867 = vmatprep.subr.mxu0 0.0
        %868 = vmatpush1.msra.mxu0 0.0
        %869 = vmatprep.subr.mxu0 0.0
        %870 = vmatpush1.msra.mxu0 0.0
        %871 = vmatprep.subr.mxu0 0.0
        %872 = vmatpush1.msra.mxu0 0.0
        %873 = vmatprep.subr.mxu0 0.0
        %874 = vmatpush1.msra.mxu0 0.0
        %875 = vmatprep.subr.mxu0 0.0
        %876 = vmatpush1.msra.mxu0 0.0
        %877 = vmatprep.subr.mxu0 0.0
        %878 = vmatpush1.msra.mxu0 0.0
        %879 = vmatprep.mubr.f32.mxu0 0.0
        %v880 = vand.u32 %v315, 4294901760
        %881 = vmatmul.mubr.f32.gmra.mrb[0].mxu0 %v880
        %v882 = vpop.f32.mrb[0].mxu0
        %v883 = vadd.f32 %v764, %v882
        %v884 = vpop.f32.mrb[0].mxu0
        %885 = vdwg.mxu0
        %886 = vmatprep.subr.mxu0 0.0
        %v887 = vand.u32 %v316, 4294901760
        %888 = vmatpush1.msra.mxu0 %v887
        %889 = vmatprep.subr.mxu0 0.0
        %v890 = vand.u32 %v317, 4294901760
        %891 = vmatpush1.msra.mxu0 %v890
        %892 = vmatprep.subr.mxu0 0.0
        %v893 = vand.u32 %v318, 4294901760
        %894 = vmatpush1.msra.mxu0 %v893
        %895 = vmatprep.subr.mxu0 0.0
        %v896 = vand.u32 %v319, 4294901760
        %897 = vmatpush1.msra.mxu0 %v896
        %898 = vmatprep.subr.mxu0 0.0
        %v899 = vand.u32 %v320, 4294901760
        %900 = vmatpush1.msra.mxu0 %v899
        %901 = vmatprep.subr.mxu0 0.0
        %v902 = vand.u32 %v321, 4294901760
        %903 = vmatpush1.msra.mxu0 %v902
        %904 = vmatprep.subr.mxu0 0.0
        %v905 = vand.u32 %v322, 4294901760
        %906 = vmatpush1.msra.mxu0 %v905
        %907 = vmatprep.subr.mxu0 0.0
        %v908 = vand.u32 %v323, 4294901760
        %909 = vmatpush1.msra.mxu0 %v908
        %910 = vmatprep.subr.mxu0 0.0
        %v911 = vand.u32 %v324, 4294901760
        %912 = vmatpush1.msra.mxu0 %v911
        %913 = vmatprep.subr.mxu0 0.0
        %v914 = vand.u32 %v325, 4294901760
        %915 = vmatpush1.msra.mxu0 %v914
        %916 = vmatprep.subr.mxu0 0.0
        %v917 = vand.u32 %v326, 4294901760
        %918 = vmatpush1.msra.mxu0 %v917
        %919 = vmatprep.subr.mxu0 0.0
        %v920 = vand.u32 %v327, 4294901760
        %921 = vmatpush1.msra.mxu0 %v920
        %922 = vmatprep.subr.mxu0 0.0
        %v923 = vand.u32 %v328, 4294901760
        %924 = vmatpush1.msra.mxu0 %v923
        %925 = vmatprep.subr.mxu0 0.0
        %v926 = vand.u32 %v329, 4294901760
        %927 = vmatpush1.msra.mxu0 %v926
        %928 = vmatprep.subr.mxu0 0.0
        %v929 = vand.u32 %v330, 4294901760
        %930 = vmatpush1.msra.mxu0 %v929
        %931 = vmatprep.subr.mxu0 0.0
        %v932 = vand.u32 %v331, 4294901760
        %933 = vmatpush1.msra.mxu0 %v932
        %934 = vmatprep.subr.mxu0 0.0
        %935 = vmatpush1.msra.mxu0 0.0
        %936 = vmatprep.subr.mxu0 0.0
        %937 = vmatpush1.msra.mxu0 0.0
        %938 = vmatprep.subr.mxu0 0.0
        %939 = vmatpush1.msra.mxu0 0.0
        %940 = vmatprep.subr.mxu0 0.0
        %941 = vmatpush1.msra.mxu0 0.0
        %942 = vmatprep.subr.mxu0 0.0
        %943 = vmatpush1.msra.mxu0 0.0
        %944 = vmatprep.subr.mxu0 0.0
        %945 = vmatpush1.msra.mxu0 0.0
        %946 = vmatprep.subr.mxu0 0.0
        %947 = vmatpush1.msra.mxu0 0.0
        %948 = vmatprep.subr.mxu0 0.0
        %949 = vmatpush1.msra.mxu0 0.0
        %950 = vmatprep.subr.mxu0 0.0
        %951 = vmatpush1.msra.mxu0 0.0
        %952 = vmatprep.subr.mxu0 0.0
        %953 = vmatpush1.msra.mxu0 0.0
        %954 = vmatprep.subr.mxu0 0.0
        %955 = vmatpush1.msra.mxu0 0.0
        %956 = vmatprep.subr.mxu0 0.0
        %957 = vmatpush1.msra.mxu0 0.0
        %958 = vmatprep.subr.mxu0 0.0
        %959 = vmatpush1.msra.mxu0 0.0
        %960 = vmatprep.subr.mxu0 0.0
        %961 = vmatpush1.msra.mxu0 0.0
        %962 = vmatprep.subr.mxu0 0.0
        %963 = vmatpush1.msra.mxu0 0.0
        %964 = vmatprep.subr.mxu0 0.0
        %965 = vmatpush1.msra.mxu0 0.0
        %966 = vmatprep.mubr.f32.mxu0 0.0
        %v967 = vand.u32 %v315, 4294901760
        %968 = vmatmul.mubr.f32.gmra.mrb[0].mxu0 %v967
        %v969 = vpop.f32.mrb[0].mxu0
        %v970 = vadd.f32 %v883, %v969
        %v971 = vpop.f32.mrb[0].mxu0
        %972 = vdwg.mxu0
        %v973 = vadd.f32 %v313, %v970
        %974 = vst [vmem:[#allocation2] sm:$0xff] %v973
        %v975 = vld [vmem:[#allocation3] sm:$0xff]
        %976 = vadd.xlane.f32.xlu0 %v315
        %v977 = vpop.xlane.xlu0 %976
        %v978 = vadd.f32 %v975, %v977
        %vm979 = vcmask 7168
        %980 = vst.msk [vmem:[#allocation3] sm:$0xff] %vm979, %v978
        // Predicated region
        $region45: #{tpu_custom_call.1} parent=31 // pred_check
          %p981 = pneg %p282
        $region46: #{tpu_custom_call.1} parent=31 // pred_check_branch
          %983 = sbr.rel (%p981) target = $region48
        $region47: #{tpu_custom_call.1} parent=31 // pred_region
          %v984 = vld [vmem:[#allocation2] sm:$0xff]
          %v985 = vld [vmem:[#allocation6] sm:$0xff]
          %v986 = vmul.f32 %v984, %v985
          %987 = vadd.xlane.f32.xlu0 %v986
          %v988 = vpop.xlane.xlu0 %987
          %989 = vst.msk [vmem:[%s277] sm:$0xff] %vm979, %v988
          %v990 = vld [vmem:[#allocation3] sm:$0xff]
          %991 = vst.msk [vmem:[%s281] sm:$0xff] %vm979, %v990
        $region48: #{tpu_custom_call.1} parent=31 // pred_fallthru
          _
        %p992 = scmp.lt.s32.totalorder %s24, 1
        %s993 = scalar_select %p992, %s24, 1
        %s994 = smul.addr %s993, 8
        %s995 = scalar_lea.vmem %s3, %s994
        %p996 = scmp.lt.s32.totalorder %s24, 1
        %s997 = scalar_select %p996, %s24, 1
        %s998 = smul.addr %s997, 8
        %s999 = scalar_lea.vmem %s4, %s998
        // Predicated region
        $region49: #{tpu_custom_call.1} parent=31 // pred_check
          %p1000 = pneg %p127
        $region50: #{tpu_custom_call.1} parent=31 // pred_check_branch
          %1002 = sbr.rel (%p1000) target = $region52
        $region51: #{tpu_custom_call.1} parent=31 // pred_region
          _
        $region52: #{tpu_custom_call.1} parent=31 // pred_fallthru
          _
        // Predicated region
        $region53: #{tpu_custom_call.1} parent=31 // pred_check
          %p1003 = pneg %p153
        $region54: #{tpu_custom_call.1} parent=31 // pred_check_branch
          %1005 = sbr.rel (%p1003) target = $region56
        $region55: #{tpu_custom_call.1} parent=31 // pred_region
          _
        $region56: #{tpu_custom_call.1} parent=31 // pred_fallthru
          _
      $region32: #{tpu_custom_call.1} parent=5 // pred_fallthru
        _
      %p1006 = scmp.le.s32.totalorder 2, %s15
      // Predicated region
      $region57: #{tpu_custom_call.1} parent=5 // pred_check
        %p1007 = pneg %p1006
      $region58: #{tpu_custom_call.1} parent=5 // pred_check_branch
        %1009 = sbr.rel (%p1007) target = $region60
      $region59: #{tpu_custom_call.1} parent=5 // pred_region
        %s1010 = ssub.s32 %s15, 2
        // Predicated region
        $region61: #{tpu_custom_call.1} parent=59 // pred_check
          %p1011 = pneg %p133
        $region62: #{tpu_custom_call.1} parent=59 // pred_check_branch
          %1013 = sbr.rel (%p1011) target = $region64
        $region63: #{tpu_custom_call.1} parent=59 // pred_region
          %p1014 = scmp.lt.s32.totalorder %s26, 1
          %s1015 = scalar_select %p1014, %s26, 1
          %s1016 = smul.addr %s1015, 8
          %s1017 = scalar_lea.vmem %s3, %s1016
        $region64: #{tpu_custom_call.1} parent=59 // pred_fallthru
          _
        // Predicated region
        $region65: #{tpu_custom_call.1} parent=59 // pred_check
          %p1018 = pneg %p159
        $region66: #{tpu_custom_call.1} parent=59 // pred_check_branch
          %1020 = sbr.rel (%p1018) target = $region68
        $region67: #{tpu_custom_call.1} parent=59 // pred_region
          %p1021 = scmp.lt.s32.totalorder %s26, 1
          %s1022 = scalar_select %p1021, %s26, 1
          %s1023 = smul.addr %s1022, 8
          %s1024 = scalar_lea.vmem %s4, %s1023
        $region68: #{tpu_custom_call.1} parent=59 // pred_fallthru
          _
      $region60: #{tpu_custom_call.1} parent=5 // pred_fallthru
        _
    $region6: #{tpu_custom_call.1} parent=1 // loop_footer
      %s19 = sadd.s32 1, %s15
    $region7: #{tpu_custom_call.1} parent=1 // loop_footer_branch
      %14 = sbr.rel target = $region3
    $region8: #{tpu_custom_call.1} parent=1 // loop_exit
      _
    %1025 = vsyncpa [#allocation5], 1
    %s1026 = scalar_lea.sflag [#allocation5], 1
    %1027 = vsyncpa %s1026, 1
    %1028 = vsyncpa [#allocation7], 1

</llo_original>
